<compile_context>
chip_gen: v5e
topology: v5e:2x2
jax: 0.10.0
libtpu: 0.0.40
codegen_flags: <defaults>
</compile_context>

<pallas_src>
import math

import jax
import jax.numpy as jnp
from jax.experimental import pallas as pl
from jax.experimental.pallas import tpu as pltpu


# ---------------------------------------------------------------------------
# Kernels
# ---------------------------------------------------------------------------
def _patch_embed_kernel_fused(x_ref, w_ref, add_ref, o_ref):
    """Single-K-block path: whole reduction in one MXU dot, direct store.

    x_ref   : (tm, K_pad)  patch block of image b (batch dim squeezed)
    w_ref   : (K_pad, tn)  block of the pre-transposed weight (K, E)
    add_ref : (tm, tn)     block of (bias + pos_embed[1:]) table, f32
    o_ref   : (tm, tn)     output block of image b
    """
    o_ref[...] = (
        add_ref[...]
        + jnp.dot(x_ref[...], w_ref[...], preferred_element_type=jnp.float32)
    ).astype(o_ref.dtype)


def _patch_embed_kernel_acc(x_ref, w_ref, add_ref, o_ref, acc_ref):
    """K-tiled fallback: f32 accumulator across the k grid axis."""
    k = pl.program_id(3)

    @pl.when(k == 0)
    def _init():
        # Fold bias + positional embedding into the accumulator init -> the
        # finalize step is a pure cast + lane-dense store.
        acc_ref[...] = add_ref[...]

    acc_ref[...] += jnp.dot(
        x_ref[...], w_ref[...], preferred_element_type=jnp.float32
    )

    @pl.when(k == pl.num_programs(3) - 1)
    def _finalize():
        o_ref[...] = acc_ref[...].astype(o_ref.dtype)


# ---------------------------------------------------------------------------
# Tiling helpers
# ---------------------------------------------------------------------------
def _round_up(x, m):
    return ((x + m - 1) // m) * m


def _choose_tile(dim, max_tile, align):
    """Return (tile, padded_dim): tile is a multiple of `align`, <= max_tile
    (when possible), and divides padded_dim."""
    max_tile = max(max_tile, align)
    aligned = _round_up(dim, align)
    if aligned <= max_tile:
        return aligned, aligned
    for t in range(max_tile - max_tile % align, align - 1, -align):
        if aligned % t == 0:
            return t, aligned
    return max_tile, _round_up(dim, max_tile)


# ---------------------------------------------------------------------------
# Wrapper
# ---------------------------------------------------------------------------
def patch_embedding_2d(
    x,
    weight,
    bias,
    cls_token,
    pos_embed,
    *,
    patch_size,
    tm=256,
    tn=512,
    tk=2048,
    compute_dtype=None,
):
    """Forward pass of PatchEmbedding2D (summa_dim == 1).

    x         : (B, C, H, W)
    weight    : (E, C, ph, pw)
    bias      : (E,)
    cls_token : (1, 1, E)
    pos_embed : (1, num_patches + 1, E)
    returns   : (B, num_patches + 1, E)
    """
    if isinstance(patch_size, int):
        patch_size = (patch_size, patch_size)
    ph, pw = patch_size

    B, C, H, W = x.shape
    assert H % ph == 0 and W % pw == 0, (H, W, ph, pw)
    gh, gw = H // ph, W // pw
    P = gh * gw

    E, C_w, ph_w, pw_w = weight.shape
    assert (C_w, ph_w, pw_w) == (C, ph, pw), (weight.shape, (C, ph, pw))
    K = C * ph * pw
    assert bias.shape == (E,)
    assert cls_token.shape == (1, 1, E)
    assert pos_embed.shape == (1, P + 1, E)

    out_dtype = x.dtype
    in_dtype = compute_dtype if compute_dtype is not None else x.dtype

    # --- im2col patch extraction (pure layout, fused by XLA) ---------------
    xp = (
        x.reshape(B, C, gh, ph, gw, pw)
        .transpose(0, 2, 4, 1, 3, 5)  # (B, gh, gw, C, ph, pw)
        .reshape(B, P, K)
    )
    # Weight pre-transposed once to (K, E): no in-kernel transpose.
    w_t = weight.reshape(E, K).T
    # Per-patch additive term (bias + patch positional embedding), kept in f32
    # because it feeds the f32 accumulation path.
    add = (bias[None, :] + pos_embed[0, 1:, :]).astype(jnp.float32)

    # --- tile / pad selection ----------------------------------------------
    tm, P_pad = _choose_tile(P, tm, 8)       # patch rows: mult of 8, bounded
    tn, N_pad = _choose_tile(E, tn, 128)     # embed cols: lane-dense (>=128)
    if K <= tk:
        K_pad = _round_up(K, 8)              # full-K block: sublane-aligned,
        tk_eff = K_pad                       # exempt from the 128 rule
    else:
        tk_eff, K_pad = _choose_tile(K, tk, 128)
    single_k = (tk_eff == K_pad)

    xp = jnp.pad(xp, ((0, 0), (0, P_pad - P), (0, K_pad - K))).astype(in_dtype)
    w_t = jnp.pad(w_t, ((0, K_pad - K), (0, N_pad - E))).astype(in_dtype)
    add = jnp.pad(add, ((0, P_pad - P), (0, N_pad - E)))

    # Grid order (j, p, b, k): weight (k, j) and add (p, j) block indices are
    # constant across the inner batch loop -> fetched ~once, not B times.
    grid = (N_pad // tn, P_pad // tm, B, K_pad // tk_eff)

    if single_k:
        kernel = _patch_embed_kernel_fused
        scratch_shapes = []
    else:
        kernel = _patch_embed_kernel_acc
        scratch_shapes = [pltpu.VMEM((tm, tn), jnp.float32)]

    out3d = pl.pallas_call(
        kernel,
        out_shape=jax.ShapeDtypeStruct((B, P_pad, N_pad), out_dtype),
        grid_spec=pltpu.PrefetchScalarGridSpec(
            num_scalar_prefetch=0,
            grid=grid,
            in_specs=[
                # patches: batch dim squeezed -> kernel sees (tm, tk)
                pl.BlockSpec((None, tm, tk_eff), lambda j, p, b, k: (b, p, k)),
                # pre-transposed weight (K, E): resident across b (and p)
                pl.BlockSpec((tk_eff, tn), lambda j, p, b, k: (k, j)),
                # bias + pos table (P, E): resident across b and k
                pl.BlockSpec((tm, tn), lambda j, p, b, k: (p, j)),
            ],
            out_specs=pl.BlockSpec((None, tm, tn), lambda j, p, b, k: (b, p, j)),
            scratch_shapes=scratch_shapes,
        ),
        compiler_params=pltpu.CompilerParams(
            dimension_semantics=("parallel", "parallel", "parallel", "arbitrary"),
            vmem_limit_bytes=32 * 1024 * 1024,  # fits v5e/v6e/v7x scoped VMEM
        ),
    )(xp, w_t, add)

    patch_out = out3d[:, :P, :E]  # drop padding

    # TODO(synk): cls-token prepend stays in plain JAX (single cheap copy);
    # fusing it would need element-offset output indexing for a 1-row prepend.
    cls_row = (cls_token[:, 0, :] + pos_embed[:, 0, :])[:, None, :]  # (1,1,E)
    cls_row = jnp.broadcast_to(cls_row, (B, 1, E)).astype(out_dtype)
    return jnp.concatenate([cls_row, patch_out], axis=1)


# ---------------------------------------------------------------------------
# Reference + deterministic init
# ---------------------------------------------------------------------------
def _reference(x, weight, bias, cls_token, pos_embed, patch_size):
    ph, pw = patch_size
    B, C, H, W = x.shape
    gh, gw = H // ph, W // pw
    E = weight.shape[0]
    xp = (
        x.reshape(B, C, gh, ph, gw, pw)
        .transpose(0, 2, 4, 1, 3, 5)
        .reshape(B, gh * gw, C * ph * pw)
    )
    wf = weight.reshape(E, -1)
    out = (
        jnp.einsum("bpk,ek->bpe", xp, wf, precision=jax.lax.Precision.HIGHEST)
        + bias
    )
    cls = jnp.broadcast_to(cls_token, (B, 1, E))
    out = jnp.concatenate([cls, out], axis=1)
    return out + pos_embed


def init_params(key, in_chans, patch_size, embed_size, num_patches, dtype=jnp.float32):
    ph, pw = patch_size
    fan_in = in_chans * ph * pw
    kw_, kb_, kc_, kp_ = jax.random.split(key, 4)
    # kaiming_uniform(a=sqrt(5)) over fan_in -> U(-1/sqrt(fan_in), 1/sqrt(fan_in))
    w_bound = 1.0 / math.sqrt(fan_in)
    weight = jax.random.uniform(
        kw_, (embed_size, in_chans, ph, pw), dtype=dtype, minval=-w_bound, maxval=w_bound
    )
    b_bound = math.sqrt(3.0 / fan_in)
    bias = jax.random.uniform(
        kb_, (embed_size,), dtype=dtype, minval=-b_bound, maxval=b_bound
    )
    # Module defaults init these to zeros; use small random values here so the
    # cls-token / pos-embed code paths are actually exercised by the check.
    cls_token = 0.02 * jax.random.normal(kc_, (1, 1, embed_size), dtype=dtype)
    pos_embed = 0.02 * jax.random.normal(kp_, (1, num_patches + 1, embed_size), dtype=dtype)
    return weight, bias, cls_token, pos_embed


if __name__ == "__main__":
    key = jax.random.PRNGKey(0)
    k_x, k_p = jax.random.split(key)

    batch, in_chans, img, patch, embed = 2, 4, 16, 4, 32
    grid_h = img // patch
    num_patches = grid_h * grid_h  # 16

    x = jax.random.normal(k_x, (batch, in_chans, img, img), dtype=jnp.float32)
    weight, bias, cls_token, pos_embed = init_params(
        k_p, in_chans, (patch, patch), embed, num_patches
    )

    # f32 compute path (single-K fused kernel)
    out = patch_embedding_2d(
        x, weight, bias, cls_token, pos_embed, patch_size=(patch, patch)
    )
    out = jax.block_until_ready(out)

    ref = _reference(x, weight, bias, cls_token, pos_embed, (patch, patch))
    assert out.shape == (batch, num_patches + 1, embed), out.shape
    assert jnp.allclose(out, ref, atol=1e-4, rtol=1e-4), float(
        jnp.max(jnp.abs(out - ref))
    )

    # K-tiled accumulator path (force tk < K to exercise the fallback kernel)
    out_tiled = jax.block_until_ready(
        patch_embedding_2d(
            x, weight, bias, cls_token, pos_embed,
            patch_size=(patch, patch), tk=32,
        )
    )
    assert jnp.allclose(out_tiled, ref, atol=1e-4, rtol=1e-4), float(
        jnp.max(jnp.abs(out_tiled - ref))
    )

    # bf16-input / f32-accumulate path (v6e/v7x MXU recipe)
    out_bf16 = jax.block_until_ready(
        patch_embedding_2d(
            x, weight, bias, cls_token, pos_embed,
            patch_size=(patch, patch), compute_dtype=jnp.bfloat16,
        )
    )
    assert out_bf16.shape == (batch, num_patches + 1, embed), out_bf16.shape
    assert jnp.allclose(out_bf16, ref, atol=1e-1, rtol=1e-1), float(
        jnp.max(jnp.abs(out_bf16 - ref))
    )

    print("KERNEL_OK")
</pallas_src>

<mosaic_0001>
module attributes {stable_mosaic.version = 11 : i64} {
  func.func @_patch_embed_kernel_fused(%arg0: i32, %arg1: i32, %arg2: i32, %arg3: i32, %arg4: memref<1x16x64xf32, #tpu.memory_space<vmem>>, %arg5: memref<64x128xf32, #tpu.memory_space<vmem>>, %arg6: memref<16x128xf32, #tpu.memory_space<vmem>>, %arg7: memref<1x16x128xf32, #tpu.memory_space<vmem>>) attributes {dimension_semantics = [#tpu.dimension_semantics<parallel>, #tpu.dimension_semantics<parallel>, #tpu.dimension_semantics<parallel>, #tpu.dimension_semantics<arbitrary>], iteration_bounds = array<i64: 1, 1, 2, 1>, scalar_prefetch = 0 : i64, scratch_operands = 0 : i64, tpu.core_type = #tpu.core_type<tc>, window_params = [{transform_indices = @transform_0, window_bounds = array<i64: 1, 16, 64>}, {transform_indices = @transform_1, window_bounds = array<i64: 64, 128>}, {transform_indices = @transform_2, window_bounds = array<i64: 16, 128>}, {transform_indices = @transform_3, window_bounds = array<i64: 1, 16, 128>}]} {
    %c0 = arith.constant 0 : index
    %c0_0 = arith.constant 0 : index
    %0 = vector.load %arg6[%c0, %c0_0] : memref<16x128xf32, #tpu.memory_space<vmem>>, vector<16x128xf32>
    %c0_1 = arith.constant 0 : index
    %c0_2 = arith.constant 0 : index
    %c0_3 = arith.constant 0 : index
    %1 = vector.load %arg4[%c0_1, %c0_2, %c0_3] : memref<1x16x64xf32, #tpu.memory_space<vmem>>, vector<1x16x64xf32>
    %2 = vector.shape_cast %1 : vector<1x16x64xf32> to vector<16x64xf32>
    %c0_4 = arith.constant 0 : index
    %c0_5 = arith.constant 0 : index
    %3 = vector.load %arg5[%c0_4, %c0_5] : memref<64x128xf32, #tpu.memory_space<vmem>>, vector<64x128xf32>
    %cst = arith.constant dense<0.000000e+00> : vector<16x128xf32>
    %4 = tpu.matmul %2, %3, %cst {dimension_numbers = #tpu.dot_dimension_numbers<[1], [0], [0], [1], [0, 0, 1, 1], [], []>} : vector<16x64xf32>, vector<64x128xf32>, vector<16x128xf32> -> vector<16x128xf32>
    %5 = arith.addf %0, %4 : vector<16x128xf32>
    %c0_6 = arith.constant 0 : index
    %c0_7 = arith.constant 0 : index
    %c0_8 = arith.constant 0 : index
    %6 = vector.load %arg7[%c0_6, %c0_7, %c0_8] : memref<1x16x128xf32, #tpu.memory_space<vmem>>, vector<1x16x128xf32>
    %7 = vector.shape_cast %6 : vector<1x16x128xf32> to vector<16x128xf32>
    %8 = vector.shape_cast %5 : vector<16x128xf32> to vector<1x16x128xf32>
    tpu.vector_store %arg7[%c0_6, %c0_7, %c0_8], %8 {strides = array<i32>} : memref<1x16x128xf32, #tpu.memory_space<vmem>>, vector<1x16x128xf32>,
    return
  }
  func.func @transform_0(%arg0: i32, %arg1: i32, %arg2: i32, %arg3: i32) -> (i32, i32, i32) {
    %c0_i32 = arith.constant 0 : i32
    return %arg2, %arg1, %arg3 : i32, i32, i32
  }
  func.func @transform_1(%arg0: i32, %arg1: i32, %arg2: i32, %arg3: i32) -> (i32, i32) {
    %c0_i32 = arith.constant 0 : i32
    return %arg3, %arg0 : i32, i32
  }
  func.func @transform_2(%arg0: i32, %arg1: i32, %arg2: i32, %arg3: i32) -> (i32, i32) {
    %c0_i32 = arith.constant 0 : i32
    return %arg1, %arg0 : i32, i32
  }
  func.func @transform_3(%arg0: i32, %arg1: i32, %arg2: i32, %arg3: i32) -> (i32, i32, i32) {
    %c0_i32 = arith.constant 0 : i32
    return %arg2, %arg1, %arg0 : i32, i32, i32
  }
}

</mosaic_0001>

<llo_original>
// kernel: tpu_custom_call.1
$region0: #{tpu_custom_call.1}
  #allocation0 [shape = 'u32[]', space=smem, size = 0x4, offset = 0x4, fixed_abs, tag = 'smem constant byte address 0x4 - core index']
  #allocation1 [shape = 'u32[72,128]{1,0:T(1,128)}', space=vmem, size = 0x9000, scoped, tag = 'internal scratch']
  %s0 = inlined_call_operand.hbm [shape: f32[2,16,64], index: 0, kind: input, shape index: {}]
  %s1 = inlined_call_operand.hbm [shape: f32[64,128], index: 1, kind: input, shape index: {}]
  %s2 = inlined_call_operand.hbm [shape: f32[16,128], index: 2, kind: input, shape index: {}]
  %s3 = inlined_call_operand.hbm [shape: f32[2,16,128], index: 3, kind: output, shape index: {}]
  %s4 = sld [smem:[#allocation0]]
  $region57: #{tpu_custom_call.1} parent=0
    _
  %s6 = ssub.s32 1, %s4
  %s7 = scalar_select 0, %s6, %s4
  $region1: #{tpu_custom_call.1} parent=0
    #allocation2 [shape = 'u8[16384]{0}', space=vmem, size = 0x4000, scoped, tag = 'input window, operand 0']
    #allocation3 [shape = 's32[2]{0}', space=sflag, size = 0x8, scoped, tag = 'scoped memory for tpu_custom_call.1']
    #allocation4 [shape = 's32[2]{0}', space=sflag, size = 0x8, scoped, tag = 'scoped memory for tpu_custom_call.1']
    #allocation5 [shape = 'u8[32768]{0}', space=vmem, size = 0x8000, scoped, tag = 'input window, operand 1, single buffered']
    #allocation6 [shape = 's32[1]{0}', space=sflag, size = 0x4, scoped, tag = 'scoped memory for tpu_custom_call.1']
    #allocation7 [shape = 'u8[8192]{0}', space=vmem, size = 0x2000, scoped, tag = 'input window, operand 2, single buffered']
    #allocation8 [shape = 'u8[16384]{0}', space=vmem, size = 0x4000, scoped, tag = 'output window, operand 0']
    %8 = vsyncpa [#allocation3], 0
    %s9 = scalar_lea.sflag [#allocation3], 1
    %10 = vsyncpa %s9, 0
    %11 = vsyncpa [#allocation6], 0
    %12 = vsyncpa [#allocation4], 0
    %s13 = scalar_lea.sflag [#allocation4], 1
    %14 = vsyncpa %s13, 0
    loop: start=0, step=1, limit=4
    $region2: #{tpu_custom_call.1} parent=1 // loop_pre_header
      _
    $region3: #{tpu_custom_call.1} parent=1 // loop_header
      %s16 = sphi 0, %s20
      %p17 = scmp.ge.s32.totalorder %s16, 4
      %s23 = sphi 0, %s49
      %s24 = sphi 0, %s45
      %s25 = sphi 0, %s41
      %s26 = sphi 0, %s37
      %s27 = sphi 0, %s23
      %s28 = sphi 0, %s24
      %s29 = sphi 0, %s25
      %s30 = sphi 0, %s26
      %s31 = sphi 0, %s27
      %s32 = sphi 0, %s28
      %s33 = sphi 0, %s29
      %s34 = sphi 0, %s30
      %s56 = sphi 0, %s58
      %s59 = sphi 0, %s56
      %s60 = sphi 0, %s59
      %s76 = sphi 0, %s60
      %s84 = sphi 0, %s86
      %s87 = sphi 0, %s84
      %s88 = sphi 0, %s87
      %s104 = sphi 0, %s88
      %s112 = sphi 0, %s114
      %s115 = sphi 0, %s112
      %s116 = sphi 0, %s115
      %s132 = sphi 0, %s116
      %s142 = sphi 0, %s144
      %s145 = sphi 0, %s142
      %s146 = sphi 0, %s145
      %s162 = sphi 0, %s146
    $region4: #{tpu_custom_call.1} parent=1 // loop_header_branch
      %19 = sbr.rel (%p17) target = $region8
    $region5: #{tpu_custom_call.1} parent=1 // loop_body
      %s21 = ssub.s32 %s16, 1
      %s22 = ssub.s32 %s16, 2
      %s35 = sadd.s32 1, %s26
      %p36 = scmp.ge.s32.totalorder %s35, 1
      %s37 = scalar_select %p36, 0, %s35
      %s38 = sadd.s32 1, %s25
      %s39 = scalar_select %p36, %s38, %s25
      %p40 = scmp.ge.s32.totalorder %s39, 2
      %s41 = scalar_select %p40, 0, %s39
      %s42 = sadd.s32 1, %s24
      %s43 = scalar_select %p40, %s42, %s24
      %p44 = scmp.ge.s32.totalorder %s43, 1
      %s45 = scalar_select %p44, 0, %s43
      %s46 = sadd.s32 1, %s23
      %s47 = scalar_select %p44, %s46, %s23
      %p48 = scmp.ge.s32.totalorder %s47, 1
      %s49 = scalar_select %p48, 0, %s47
      %s50 = ssub.s32 %s25, %s41
      %s51 = ssub.s32 %s24, %s45
      %s52 = sor.u32 %s50, %s51
      %s53 = ssub.s32 %s26, %s37
      %s54 = sor.u32 %s52, %s53
      %p55 = scmp.eq.s32.totalorder %s54, 0
      %s57 = sadd.s32 %s56, 1
      %s58 = scalar_select %p55, %s56, %s57
      %p61 = pneg %p55
      %p62 = scmp.eq.s32.totalorder %s16, 1
      %p63 = por %p61, %p62
      %p64 = scmp.ne.s32.totalorder %s56, %s59
      %p65 = scmp.eq.s32.totalorder %s16, 0
      %p66 = por %p64, %p65
      %p67 = scmp.ne.s32.totalorder %s56, %s59
      %p68 = scmp.eq.s32.totalorder %s21, 1
      %p69 = por %p67, %p68
      %p70 = scmp.ne.s32.totalorder %s59, %s60
      %p71 = scmp.eq.s32.totalorder %s21, 0
      %p72 = por %p70, %p71
      %p73 = scmp.ne.s32.totalorder %s59, %s60
      %p74 = scmp.eq.s32.totalorder %s22, 1
      %p75 = por %p73, %p74
      %p77 = scmp.ne.s32.totalorder %s60, %s76
      %p78 = scmp.eq.s32.totalorder %s22, 0
      %p79 = por %p77, %p78
      %s80 = ssub.s32 %s26, %s37
      %s81 = ssub.s32 %s23, %s49
      %s82 = sor.u32 %s80, %s81
      %p83 = scmp.eq.s32.totalorder %s82, 0
      %s85 = sadd.s32 %s84, 1
      %s86 = scalar_select %p83, %s84, %s85
      %p89 = pneg %p83
      %p90 = scmp.eq.s32.totalorder %s16, 1
      %p91 = por %p89, %p90
      %p92 = scmp.ne.s32.totalorder %s84, %s87
      %p93 = scmp.eq.s32.totalorder %s16, 0
      %p94 = por %p92, %p93
      %p95 = scmp.ne.s32.totalorder %s84, %s87
      %p96 = scmp.eq.s32.totalorder %s21, 1
      %p97 = por %p95, %p96
      %p98 = scmp.ne.s32.totalorder %s87, %s88
      %p99 = scmp.eq.s32.totalorder %s21, 0
      %p100 = por %p98, %p99
      %p101 = scmp.ne.s32.totalorder %s87, %s88
      %p102 = scmp.eq.s32.totalorder %s22, 1
      %p103 = por %p101, %p102
      %p105 = scmp.ne.s32.totalorder %s88, %s104
      %p106 = scmp.eq.s32.totalorder %s22, 0
      %p107 = por %p105, %p106
      %s108 = ssub.s32 %s24, %s45
      %s109 = ssub.s32 %s23, %s49
      %s110 = sor.u32 %s108, %s109
      %p111 = scmp.eq.s32.totalorder %s110, 0
      %s113 = sadd.s32 %s112, 1
      %s114 = scalar_select %p111, %s112, %s113
      %p117 = pneg %p111
      %p118 = scmp.eq.s32.totalorder %s16, 1
      %p119 = por %p117, %p118
      %p120 = scmp.ne.s32.totalorder %s112, %s115
      %p121 = scmp.eq.s32.totalorder %s16, 0
      %p122 = por %p120, %p121
      %p123 = scmp.ne.s32.totalorder %s112, %s115
      %p124 = scmp.eq.s32.totalorder %s21, 1
      %p125 = por %p123, %p124
      %p126 = scmp.ne.s32.totalorder %s115, %s116
      %p127 = scmp.eq.s32.totalorder %s21, 0
      %p128 = por %p126, %p127
      %p129 = scmp.ne.s32.totalorder %s115, %s116
      %p130 = scmp.eq.s32.totalorder %s22, 1
      %p131 = por %p129, %p130
      %p133 = scmp.ne.s32.totalorder %s116, %s132
      %p134 = scmp.eq.s32.totalorder %s22, 0
      %p135 = por %p133, %p134
      %s136 = ssub.s32 %s25, %s41
      %s137 = ssub.s32 %s24, %s45
      %s138 = sor.u32 %s136, %s137
      %s139 = ssub.s32 %s23, %s49
      %s140 = sor.u32 %s138, %s139
      %p141 = scmp.eq.s32.totalorder %s140, 0
      %s143 = sadd.s32 %s142, 1
      %s144 = scalar_select %p141, %s142, %s143
      %p147 = pneg %p141
      %p148 = scmp.eq.s32.totalorder %s16, 1
      %p149 = por %p147, %p148
      %p150 = scmp.ne.s32.totalorder %s142, %s145
      %p151 = scmp.eq.s32.totalorder %s16, 0
      %p152 = por %p150, %p151
      %p153 = scmp.ne.s32.totalorder %s142, %s145
      %p154 = scmp.eq.s32.totalorder %s21, 1
      %p155 = por %p153, %p154
      %p156 = scmp.ne.s32.totalorder %s145, %s146
      %p157 = scmp.eq.s32.totalorder %s21, 0
      %p158 = por %p156, %p157
      %p159 = scmp.ne.s32.totalorder %s145, %s146
      %p160 = scmp.eq.s32.totalorder %s22, 1
      %p161 = por %p159, %p160
      %p163 = scmp.ne.s32.totalorder %s146, %s162
      %p164 = scmp.eq.s32.totalorder %s22, 0
      %p165 = por %p163, %p164
      %p166 = scmp.le.s32.totalorder 1, %s16
      %p167 = scmp.lt.s32.totalorder %s16, 3
      %p168 = pnand %p166, %p167
      %p169 = pneg %p168
      // Predicated region
      $region9: #{tpu_custom_call.1} parent=5 // pred_check
        _
      $region10: #{tpu_custom_call.1} parent=5 // pred_check_branch
        %171 = sbr.rel (%p168) target = $region12
      $region11: #{tpu_custom_call.1} parent=5 // pred_region
        %s172 = ssub.s32 %s16, 1
        // Predicated region
        $region13: #{tpu_custom_call.1} parent=11 // pred_check
          %p173 = pneg %p100
        $region14: #{tpu_custom_call.1} parent=11 // pred_check_branch
          %175 = sbr.rel (%p173) target = $region16
        $region15: #{tpu_custom_call.1} parent=11 // pred_region
          %s176 = smul.u32 8, %s30
          %178 = vsyncadd [#allocation6], 0
          %s179 = sadd.s32 %s27, %s176
          %s180 = smul.addr %s179, 8
          %s181 = scalar_lea.hbm %s1, %s180
          %s182 = sshll.u32 %s181, 4
          %s183 = int_to_ptr.hbm [resolvable:$true] %s182
          %s184 = sshll.u32 [#allocation5], 4
          %s185 = int_to_ptr.vmem [resolvable:$true] %s184
          %190 = dma.hbm_to_vmem [thread:$0]  %s183, 1024, %s185, [#allocation6], 128, 128, 8
        $region16: #{tpu_custom_call.1} parent=11 // pred_fallthru
          _
        // Predicated region
        $region17: #{tpu_custom_call.1} parent=11 // pred_check
          %p191 = pneg %p128
        $region18: #{tpu_custom_call.1} parent=11 // pred_check_branch
          %193 = sbr.rel (%p191) target = $region20
        $region19: #{tpu_custom_call.1} parent=11 // pred_region
          %s194 = smul.u32 2, %s28
          %196 = vsyncadd [#allocation6], 0
          %s197 = sadd.s32 %s27, %s194
          %s198 = smul.addr %s197, 8
          %s199 = scalar_lea.hbm %s2, %s198
          %s200 = sshll.u32 %s199, 4
          %s201 = int_to_ptr.hbm [resolvable:$true] %s200
          %s202 = sshll.u32 [#allocation7], 4
          %s203 = int_to_ptr.vmem [resolvable:$true] %s202
          %208 = dma.hbm_to_vmem [thread:$0]  %s201, 256, %s203, [#allocation6], 128, 128, 8
        $region20: #{tpu_custom_call.1} parent=11 // pred_fallthru
          _
      $region12: #{tpu_custom_call.1} parent=5 // pred_fallthru
        _
      %p209 = scmp.lt.s32.totalorder %s16, 2
      // Predicated region
      $region21: #{tpu_custom_call.1} parent=5 // pred_check
        %p210 = pneg %p209
      $region22: #{tpu_custom_call.1} parent=5 // pred_check_branch
        %212 = sbr.rel (%p210) target = $region24
      $region23: #{tpu_custom_call.1} parent=5 // pred_region
        // Predicated region
        $region25: #{tpu_custom_call.1} parent=23 // pred_check
          %p213 = pneg %p66
        $region26: #{tpu_custom_call.1} parent=23 // pred_check_branch
          %215 = sbr.rel (%p213) target = $region28
        $region27: #{tpu_custom_call.1} parent=23 // pred_region
          %s216 = sand.u32 %s56, 1
          %s217 = scalar_lea.sflag [#allocation3], %s216
          %s218 = sand.u32 %s56, 1
          %s219 = smul.addr %s218, 16
          %s220 = scalar_lea.vmem [#allocation2], %s219
          %s221 = smul.u32 2, %s24
          %223 = vsyncadd %s217, 0
          %s224 = sadd.s32 %s26, %s221
          %s225 = smul.addr %s25, 2
          %s226 = sadd.s32 %s224, %s225
          %s227 = smul.addr %s226, 8
          %s228 = scalar_lea.hbm %s0, %s227
          %s229 = sshll.u32 %s228, 4
          %s230 = int_to_ptr.hbm [resolvable:$true] %s229
          %s231 = sshll.u32 %s220, 4
          %s232 = int_to_ptr.vmem [resolvable:$true] %s231
          %237 = dma.hbm_to_vmem [thread:$0]  %s230, 256, %s232, %s217, 128, 128, 8
        $region28: #{tpu_custom_call.1} parent=23 // pred_fallthru
          _
      $region24: #{tpu_custom_call.1} parent=5 // pred_fallthru
        _
      %p238 = scmp.le.s32.totalorder 1, %s16
      %p239 = scmp.lt.s32.totalorder %s16, 3
      %p240 = pnand %p238, %p239
      %p241 = pneg %p240
      // Predicated region
      $region29: #{tpu_custom_call.1} parent=5 // pred_check
        _
      $region30: #{tpu_custom_call.1} parent=5 // pred_check_branch
        %243 = sbr.rel (%p240) target = $region32
      $region31: #{tpu_custom_call.1} parent=5 // pred_region
        %s244 = ssub.s32 %s16, 1
        %s245 = sand.u32 %s59, 1
        %s246 = scalar_lea.sflag [#allocation3], %s245
        %s247 = sand.u32 %s59, 1
        %s248 = smul.addr %s247, 16
        %s249 = scalar_lea.vmem [#allocation2], %s248
        // Predicated region
        $region33: #{tpu_custom_call.1} parent=31 // pred_check
          %p250 = pneg %p72
        $region34: #{tpu_custom_call.1} parent=31 // pred_check_branch
          %252 = sbr.rel (%p250) target = $region36
        $region35: #{tpu_custom_call.1} parent=31 // pred_region
          %254 = dma.done %s246, 256
        $region36: #{tpu_custom_call.1} parent=31 // pred_fallthru
          _
        // Predicated region
        $region37: #{tpu_custom_call.1} parent=31 // pred_check
          %p255 = pneg %p100
        $region38: #{tpu_custom_call.1} parent=31 // pred_check_branch
          %257 = sbr.rel (%p255) target = $region40
        $region39: #{tpu_custom_call.1} parent=31 // pred_region
          %259 = dma.done [#allocation6], 1024
        $region40: #{tpu_custom_call.1} parent=31 // pred_fallthru
          _
        // Predicated region
        $region41: #{tpu_custom_call.1} parent=31 // pred_check
          %p260 = pneg %p128
        $region42: #{tpu_custom_call.1} parent=31 // pred_check_branch
          %262 = sbr.rel (%p260) target = $region44
        $region43: #{tpu_custom_call.1} parent=31 // pred_region
          %264 = dma.done [#allocation6], 256
        $region44: #{tpu_custom_call.1} parent=31 // pred_fallthru
          _
        %s265 = sand.u32 %s59, 1
        %s266 = scalar_lea.sflag [#allocation3], %s265
        %s267 = sand.u32 %s59, 1
        %s268 = smul.addr %s267, 16
        %s269 = scalar_lea.vmem [#allocation2], %s268
        %p270 = pneg %p72
        %p271 = pneg %p69
        %p272 = pneg %p100
        %p273 = pneg %p97
        %p274 = pneg %p128
        %p275 = pneg %p125
        %p276 = pneg %p158
        %p277 = pneg %p155
        %s278 = sand.u32 %s145, 1
        %s279 = scalar_lea.sflag [#allocation4], %s278
        %s280 = sand.u32 %s145, 1
        %s281 = smul.addr %s280, 16
        %s282 = scalar_lea.vmem [#allocation8], %s281
        %s283 = smul.u32 2, %s28
        %s284 = smul.u32 8, %s30
        %s285 = smul.u32 2, %s28
        %s286 = smul.u32 2, %s28
        %v287 = vld [vmem:[#allocation7] sm:$0xff]
        %v288 = vld [vmem:[#allocation7 + $0x8] sm:$0xff]
        %v289 = vld [vmem:[%s249] sm:$0xff]
        %v290 = vld [vmem:[%s249 + $0x8] sm:$0xff]
        %v291 = vld [vmem:[#allocation5] sm:$0xff]
        %v292 = vld [vmem:[#allocation5 + $0x8] sm:$0xff]
        %v293 = vld [vmem:[#allocation5 + $0x10] sm:$0xff]
        %v294 = vld [vmem:[#allocation5 + $0x18] sm:$0xff]
        %v295 = vld [vmem:[#allocation5 + $0x20] sm:$0xff]
        %v296 = vld [vmem:[#allocation5 + $0x28] sm:$0xff]
        %v297 = vld [vmem:[#allocation5 + $0x30] sm:$0xff]
        %v298 = vld [vmem:[#allocation5 + $0x38] sm:$0xff]
        %vm299 = vcmask 523264
        %v301 = vsel %vm299, %v289, 0
        %v304 = vsel %vm299, %v290, 0
        %306 = vmatpush.msra.mxu0 0.0
        %307 = vmatpush.msra.mxu0 0.0
        %308 = vmatpush.msra.mxu0 0.0
        %309 = vmatpush.msra.mxu0 0.0
        %310 = vmatpush.msra.mxu0 0.0
        %311 = vmatpush.msra.mxu0 0.0
        %312 = vmatpush.msra.mxu0 0.0
        %313 = vmatpush.msra.mxu0 0.0
        %314 = vmatpush.msra.mxu0 %v298
        %315 = vmatpush.msra.mxu0 %v297
        %316 = vmatpush.msra.mxu0 %v296
        %317 = vmatpush.msra.mxu0 %v295
        %318 = vmatpush.msra.mxu0 %v294
        %319 = vmatpush.msra.mxu0 %v293
        %320 = vmatpush.msra.mxu0 %v292
        %321 = vmatpush.msra.mxu0 %v291
        %322 = vmatmul.f32.gmra.mxu0 %v301
        %v323 = vpop.f32.mrf.mxu0
        %v324 = vadd.f32 0.0, %v323
        %325 = vmatmul.f32.gmra.mxu0 %v304
        %v326 = vpop.f32.mrf.mxu0
        %v327 = vadd.f32 0.0, %v326
        %328 = vdwg.mxu0
        %v329 = vadd.f32 %v287, %v324
        %v330 = vadd.f32 %v288, %v327
        %331 = vst [vmem:[%s282] sm:$0xff] %v329
        %332 = vst [vmem:[%s282 + $0x8] sm:$0xff] %v330
        %s333 = sand.u32 %s145, 1
        %s334 = scalar_lea.sflag [#allocation4], %s333
        %s335 = sand.u32 %s145, 1
        %s336 = smul.addr %s335, 16
        %s337 = scalar_lea.vmem [#allocation8], %s336
        // Predicated region
        $region45: #{tpu_custom_call.1} parent=31 // pred_check
          %p338 = pneg %p155
        $region46: #{tpu_custom_call.1} parent=31 // pred_check_branch
          %340 = sbr.rel (%p338) target = $region48
        $region47: #{tpu_custom_call.1} parent=31 // pred_region
          %s341 = smul.u32 2, %s28
          %343 = vsyncadd %s334, 0
          %s344 = sadd.s32 %s27, %s341
          %s345 = smul.addr %s29, 2
          %s346 = sadd.s32 %s344, %s345
          %s347 = smul.addr %s346, 8
          %s348 = scalar_lea.hbm %s3, %s347
          %s349 = sshll.u32 %s337, 4
          %s350 = int_to_ptr.vmem [resolvable:$true] %s349
          %s351 = sshll.u32 %s348, 4
          %s352 = int_to_ptr.hbm [resolvable:$true] %s351
          %357 = dma.vmem_to_hbm [thread:$0]  %s350, 256, %s352, %s334, 128, 128, 8
        $region48: #{tpu_custom_call.1} parent=31 // pred_fallthru
          _
      $region32: #{tpu_custom_call.1} parent=5 // pred_fallthru
        _
      %p358 = scmp.le.s32.totalorder 2, %s16
      // Predicated region
      $region49: #{tpu_custom_call.1} parent=5 // pred_check
        %p359 = pneg %p358
      $region50: #{tpu_custom_call.1} parent=5 // pred_check_branch
        %361 = sbr.rel (%p359) target = $region52
      $region51: #{tpu_custom_call.1} parent=5 // pred_region
        %s362 = ssub.s32 %s16, 2
        // Predicated region
        $region53: #{tpu_custom_call.1} parent=51 // pred_check
          %p363 = pneg %p161
        $region54: #{tpu_custom_call.1} parent=51 // pred_check_branch
          %365 = sbr.rel (%p363) target = $region56
        $region55: #{tpu_custom_call.1} parent=51 // pred_region
          %s366 = sand.u32 %s146, 1
          %s367 = scalar_lea.sflag [#allocation4], %s366
          %s368 = sand.u32 %s146, 1
          %s369 = smul.addr %s368, 16
          %s370 = scalar_lea.vmem [#allocation8], %s369
          %372 = dma.done %s367, 256
        $region56: #{tpu_custom_call.1} parent=51 // pred_fallthru
          _
      $region52: #{tpu_custom_call.1} parent=5 // pred_fallthru
        _
    $region6: #{tpu_custom_call.1} parent=1 // loop_footer
      %s20 = sadd.s32 1, %s16
    $region7: #{tpu_custom_call.1} parent=1 // loop_footer_branch
      %15 = sbr.rel target = $region3
    $region8: #{tpu_custom_call.1} parent=1 // loop_exit
      _
    %373 = vsyncpa [#allocation3], 1
    %s374 = scalar_lea.sflag [#allocation3], 1
    %375 = vsyncpa %s374, 1
    %376 = vsyncpa [#allocation6], 1
    %377 = vsyncpa [#allocation4], 1
    %s378 = scalar_lea.sflag [#allocation4], 1
    %379 = vsyncpa %s378, 1

</llo_original>
